<compile_context>
chip_gen: v6e
topology: v6e:2x2x1
jax: 0.10.0
libtpu: 0.0.40
codegen_flags: <defaults>
</compile_context>

<pallas_src>
import jax
import jax.numpy as jnp
from jax.experimental import pallas as pl
from jax.experimental.pallas import tpu as pltpu

LN_EPS = 1e-5


def _round_up(x, m):
    return ((x + m - 1) // m) * m


# ------------------------------ Pallas kernel -------------------------------

def _prenorm_linear_kernel(x_ref, g_ref, beta_ref, w_ref, b_ref, o_ref, xn_ref):
    # LayerNorm only once per row tile (at the first column tile); the
    # normalized activations are stashed in VMEM scratch and reused across j.
    @pl.when(pl.program_id(1) == 0)
    def _():
        x = x_ref[...].astype(jnp.float32)                  # (TM, D)
        inv_d = 1.0 / x.shape[-1]
        # Two independent cross-lane reductions (overlap in the XLU).
        s1 = jnp.sum(x, axis=-1, keepdims=True)
        s2 = jnp.sum(x * x, axis=-1, keepdims=True)
        mean = s1 * inv_d
        var = jnp.maximum(s2 * inv_d - mean * mean, 0.0)    # guard cancellation
        xn = (x - mean) * jax.lax.rsqrt(var + LN_EPS)       # EUP rsqrt (cheap)
        xn = xn * g_ref[...].astype(jnp.float32) + beta_ref[...].astype(jnp.float32)
        xn_ref[...] = xn.astype(xn_ref.dtype)

    # MXU consumes xn in the weight's native dtype, accumulates in f32.
    y = jnp.dot(xn_ref[...], w_ref[...], preferred_element_type=jnp.float32)
    y = y + b_ref[...].astype(jnp.float32)
    o_ref[...] = y.astype(o_ref.dtype)


# ------------------------------ JAX wrapper ---------------------------------

def prenorm_linear_forward(x, params, *, tile_m=None, tile_n=512,
                           vmem_limit_bytes=None):
    """x: (B, N, D).  Returns (B, N, D_out) = Linear(LayerNorm(x))."""
    B, N, D = x.shape
    w, b = params["w"], params["b"]                # (D, D_out), (1, D_out)
    g, beta = params["ln_g"], params["ln_b"]       # (1, D), (1, D)
    D_out = w.shape[1]
    M = B * N
    x2 = x.reshape(M, D)

    bx = x2.dtype.itemsize
    bw = w.dtype.itemsize
    bo = x.dtype.itemsize

    # Sublane packing for the storage dtype (f32: 8, bf16: 16, int8/fp8: 32).
    sub = {4: 8, 2: 16, 1: 32}.get(bx, 8)

    # ---- column tile (D_out axis): multiple of 128 or the full extent ----
    if D_out <= tile_n:
        tn = D_out
    else:
        tn = max(128, (min(int(tile_n), D_out) // 128) * 128)

    # ---- VMEM capacity, generation-aware (v7x: 64MiB, v5e/v6e: 128MiB) ----
    try:
        vmem_cap = int(pltpu.get_tpu_info().vmem_capacity_bytes)
    except Exception:
        vmem_cap = 64 << 20           # conservative fallback (works everywhere)
    cap_limit = min(int(0.75 * vmem_cap), 100 << 20)

    # ---- row tile: multi-MiB per grid step, shrunk to fit the VMEM budget ----
    if tile_m is None:
        tile_m = 4096 if bx == 4 else 8192
    m_aligned = _round_up(M, sub)
    tm = min(_round_up(max(int(tile_m), sub), sub), m_aligned)
    if tm >= 256:
        tm = (tm // 256) * 256        # full MXU passes on v6e/v7x

    def _est(tm_):
        return (2 * tm_ * D * bx            # x tiles, double-buffered
                + 2 * tm_ * tn * bo         # out tiles, double-buffered
                + 2 * D * tn * bw           # W column tiles, double-buffered
                + tm_ * D * bw              # xn scratch
                + (2 * D + tn) * bw         # gamma/beta/bias
                + 4 * tm_ * D * 4)          # f32 LN temporaries headroom

    while tm > sub and _est(tm) > cap_limit:
        tm = max(sub, _round_up(tm // 2, sub))

    if vmem_limit_bytes is None:
        vmem_limit_bytes = int(min(max(2 * _est(tm), 16 << 20), cap_limit))

    grid = (pl.cdiv(M, tm), pl.cdiv(D_out, tn))

    out = pl.pallas_call(
        _prenorm_linear_kernel,
        out_shape=jax.ShapeDtypeStruct((M, D_out), x.dtype),
        grid=grid,
        in_specs=[
            pl.BlockSpec((tm, D), lambda i, j: (i, 0)),      # x (re-used over j)
            pl.BlockSpec((1, D), lambda i, j: (0, 0)),       # gamma (resident)
            pl.BlockSpec((1, D), lambda i, j: (0, 0)),       # beta  (resident)
            pl.BlockSpec((D, tn), lambda i, j: (0, j)),      # W column tile
            pl.BlockSpec((1, tn), lambda i, j: (0, j)),      # bias column tile
        ],
        out_specs=pl.BlockSpec((tm, tn), lambda i, j: (i, j)),
        scratch_shapes=[pltpu.VMEM((tm, D), w.dtype)],       # xn, reused over j
        compiler_params=pltpu.CompilerParams(
            dimension_semantics=("parallel", "arbitrary"),
            vmem_limit_bytes=vmem_limit_bytes,
        ),
    )(x2, g, beta, w, b)

    return out.reshape(B, N, D_out)


# --------------------------- Pure-JAX reference -----------------------------

def prenorm_linear_reference(x, params):
    xf = x.astype(jnp.float32)
    mean = jnp.mean(xf, axis=-1, keepdims=True)
    var = jnp.mean((xf - mean) ** 2, axis=-1, keepdims=True)
    xn = (xf - mean) * jax.lax.rsqrt(var + LN_EPS)
    xn = xn * params["ln_g"][0].astype(jnp.float32) + params["ln_b"][0].astype(jnp.float32)
    y = jnp.einsum("bnd,de->bne", xn, params["w"].astype(jnp.float32),
                   precision=jax.lax.Precision.HIGHEST)
    return y + params["b"][0].astype(jnp.float32)


def make_params(key, D, D_out, dtype):
    """Deterministic synthetic parameters (PyTorch-Linear-like uniform init)."""
    ks = jax.random.split(key, 4)
    bound = 1.0 / jnp.sqrt(D)
    return {
        "w": jax.random.uniform(ks[0], (D, D_out), jnp.float32, -bound, bound).astype(dtype),
        "b": jax.random.uniform(ks[1], (1, D_out), jnp.float32, -bound, bound).astype(dtype),
        "ln_g": (1.0 + 0.1 * jax.random.normal(ks[2], (1, D), jnp.float32)).astype(dtype),
        "ln_b": (0.1 * jax.random.normal(ks[3], (1, D), jnp.float32)).astype(dtype),
    }


if __name__ == "__main__":
    key = jax.random.PRNGKey(0)
    kx, kp, kx2, kp2, kx3, kp3 = jax.random.split(key, 6)

    # Case 1: f32, lane-dense feature dim (multiple of 128), small token count.
    B, N, D, D_out = 2, 16, 128, 128
    x = jax.random.normal(kx, (B, N, D), jnp.float32)
    p = make_params(kp, D, D_out, jnp.float32)
    out = jax.block_until_ready(prenorm_linear_forward(x, p))
    ref = prenorm_linear_reference(x, p)
    assert out.shape == (B, N, D_out)
    assert jnp.allclose(out.astype(jnp.float32), ref, atol=2e-4, rtol=2e-4)

    # Case 2: bf16 storage — MXU consumes bf16 directly, f32 accumulation.
    xb = jax.random.normal(kx2, (B, N, D), jnp.float32).astype(jnp.bfloat16)
    pb = make_params(kp2, D, D_out, jnp.bfloat16)
    outb = jax.block_until_ready(prenorm_linear_forward(xb, pb))
    refb = prenorm_linear_reference(xb, pb)
    assert outb.shape == (B, N, D_out)
    assert jnp.allclose(outb.astype(jnp.float32), refb, atol=5e-2, rtol=5e-2)

    # Case 3: exercises the two-axis grid — ragged M (partial, masked row block),
    # column-tiled W/bias, and the xn scratch reuse across column tiles.
    B3, N3, D3, D_out3 = 3, 5, 128, 256
    x3 = jax.random.normal(kx3, (B3, N3, D3), jnp.float32)
    p3 = make_params(kp3, D3, D_out3, jnp.float32)
    out3 = jax.block_until_ready(
        prenorm_linear_forward(x3, p3, tile_m=8, tile_n=128))   # grid (2, 2)
    ref3 = prenorm_linear_reference(x3, p3)
    assert out3.shape == (B3, N3, D_out3)
    assert jnp.allclose(out3.astype(jnp.float32), ref3, atol=2e-4, rtol=2e-4)

    # TODO(synk): the PyTorch module wraps an arbitrary `fn`; only the common
    # Linear instantiation is fused here (attention/FFN fns need their own kernels).
    print("KERNEL_OK")
</pallas_src>

<mosaic_0001>
module attributes {stable_mosaic.version = 11 : i64} {
  func.func @_prenorm_linear_kernel(%arg0: i32, %arg1: i32, %arg2: memref<32x128xf32, #tpu.memory_space<vmem>>, %arg3: memref<1x128xf32, #tpu.memory_space<vmem>>, %arg4: memref<1x128xf32, #tpu.memory_space<vmem>>, %arg5: memref<128x128xf32, #tpu.memory_space<vmem>>, %arg6: memref<1x128xf32, #tpu.memory_space<vmem>>, %arg7: memref<32x128xf32, #tpu.memory_space<vmem>>, %arg8: memref<32x128xf32, #tpu.memory_space<vmem>>) attributes {dimension_semantics = [#tpu.dimension_semantics<parallel>, #tpu.dimension_semantics<arbitrary>], iteration_bounds = array<i64: 1, 1>, scalar_prefetch = 0 : i64, scratch_operands = 1 : i64, tpu.core_type = #tpu.core_type<tc>, window_params = [{transform_indices = @transform_0, window_bounds = array<i64: 32, 128>}, {pipeline_mode = #tpu.pipeline_mode<synchronous>, transform_indices = @transform_1, window_bounds = array<i64: 1, 128>}, {pipeline_mode = #tpu.pipeline_mode<synchronous>, transform_indices = @transform_2, window_bounds = array<i64: 1, 128>}, {transform_indices = @transform_3, window_bounds = array<i64: 128, 128>}, {transform_indices = @transform_4, window_bounds = array<i64: 1, 128>}, {transform_indices = @transform_5, window_bounds = array<i64: 32, 128>}]} {
    %c0_i32 = arith.constant 0 : i32
    %0 = arith.cmpi eq, %arg1, %c0_i32 : i32
    %1 = arith.extui %0 : i1 to i32
    %c0_i32_0 = arith.constant 0 : i32
    %2 = arith.cmpi ne, %1, %c0_i32_0 : i32
    scf.if %2 {
      %c0_8 = arith.constant 0 : index
      %c0_9 = arith.constant 0 : index
      %10 = vector.load %arg2[%c0_8, %c0_9] : memref<32x128xf32, #tpu.memory_space<vmem>>, vector<32x128xf32>
      %cst_10 = arith.constant dense<0.000000e+00> : vector<32xf32>
      %11 = vector.multi_reduction <add>, %10, %cst_10 [1] : vector<32x128xf32> to vector<32xf32>
      %12 = vector.shape_cast %11 : vector<32xf32> to vector<32x1xf32>
      %13 = arith.mulf %10, %10 : vector<32x128xf32>
      %cst_11 = arith.constant dense<0.000000e+00> : vector<32xf32>
      %14 = vector.multi_reduction <add>, %13, %cst_11 [1] : vector<32x128xf32> to vector<32xf32>
      %15 = vector.shape_cast %14 : vector<32xf32> to vector<32x1xf32>
      %cst_12 = arith.constant 7.812500e-03 : f32
      %16 = vector.broadcast %cst_12 : f32 to vector<32x1xf32>
      %17 = arith.mulf %12, %16 : vector<32x1xf32>
      %cst_13 = arith.constant 7.812500e-03 : f32
      %18 = vector.broadcast %cst_13 : f32 to vector<32x1xf32>
      %19 = arith.mulf %15, %18 : vector<32x1xf32>
      %20 = arith.mulf %17, %17 : vector<32x1xf32>
      %21 = arith.subf %19, %20 : vector<32x1xf32>
      %cst_14 = arith.constant 0.000000e+00 : f32
      %22 = vector.broadcast %cst_14 : f32 to vector<32x1xf32>
      %23 = arith.maximumf %21, %22 : vector<32x1xf32>
      %24 = vector.broadcast %17 : vector<32x1xf32> to vector<32x128xf32>
      %25 = arith.subf %10, %24 : vector<32x128xf32>
      %cst_15 = arith.constant 9.99999974E-6 : f32
      %26 = vector.broadcast %cst_15 : f32 to vector<32x1xf32>
      %27 = arith.addf %23, %26 : vector<32x1xf32>
      %28 = math.rsqrt %27 : vector<32x1xf32>
      %29 = vector.broadcast %28 : vector<32x1xf32> to vector<32x128xf32>
      %30 = arith.mulf %25, %29 : vector<32x128xf32>
      %c0_16 = arith.constant 0 : index
      %c0_17 = arith.constant 0 : index
      %31 = vector.load %arg3[%c0_16, %c0_17] : memref<1x128xf32, #tpu.memory_space<vmem>>, vector<1x128xf32>
      %32 = vector.broadcast %31 : vector<1x128xf32> to vector<32x128xf32>
      %33 = arith.mulf %30, %32 : vector<32x128xf32>
      %c0_18 = arith.constant 0 : index
      %c0_19 = arith.constant 0 : index
      %34 = vector.load %arg4[%c0_18, %c0_19] : memref<1x128xf32, #tpu.memory_space<vmem>>, vector<1x128xf32>
      %35 = vector.broadcast %34 : vector<1x128xf32> to vector<32x128xf32>
      %36 = arith.addf %33, %35 : vector<32x128xf32>
      %c0_20 = arith.constant 0 : index
      %c0_21 = arith.constant 0 : index
      %37 = vector.load %arg8[%c0_20, %c0_21] : memref<32x128xf32, #tpu.memory_space<vmem>>, vector<32x128xf32>
      tpu.vector_store %arg8[%c0_20, %c0_21], %36 {strides = array<i32>} : memref<32x128xf32, #tpu.memory_space<vmem>>, vector<32x128xf32>,
    } else {
    }
    %c0 = arith.constant 0 : index
    %c0_1 = arith.constant 0 : index
    %3 = vector.load %arg8[%c0, %c0_1] : memref<32x128xf32, #tpu.memory_space<vmem>>, vector<32x128xf32>
    %c0_2 = arith.constant 0 : index
    %c0_3 = arith.constant 0 : index
    %4 = vector.load %arg5[%c0_2, %c0_3] : memref<128x128xf32, #tpu.memory_space<vmem>>, vector<128x128xf32>
    %cst = arith.constant dense<0.000000e+00> : vector<32x128xf32>
    %5 = tpu.matmul %3, %4, %cst {dimension_numbers = #tpu.dot_dimension_numbers<[1], [0], [0], [1], [0, 0, 1, 1], [], []>} : vector<32x128xf32>, vector<128x128xf32>, vector<32x128xf32> -> vector<32x128xf32>
    %c0_4 = arith.constant 0 : index
    %c0_5 = arith.constant 0 : index
    %6 = vector.load %arg6[%c0_4, %c0_5] : memref<1x128xf32, #tpu.memory_space<vmem>>, vector<1x128xf32>
    %7 = vector.broadcast %6 : vector<1x128xf32> to vector<32x128xf32>
    %8 = arith.addf %5, %7 : vector<32x128xf32>
    %c0_6 = arith.constant 0 : index
    %c0_7 = arith.constant 0 : index
    %9 = vector.load %arg7[%c0_6, %c0_7] : memref<32x128xf32, #tpu.memory_space<vmem>>, vector<32x128xf32>
    tpu.vector_store %arg7[%c0_6, %c0_7], %8 {strides = array<i32>} : memref<32x128xf32, #tpu.memory_space<vmem>>, vector<32x128xf32>,
    return
  }
  func.func @transform_0(%arg0: i32, %arg1: i32) -> (i32, i32) {
    %c0_i32 = arith.constant 0 : i32
    %c0_i32_0 = arith.constant 0 : i32
    return %arg0, %c0_i32 : i32, i32
  }
  func.func @transform_1(%arg0: i32, %arg1: i32) -> (i32, i32) {
    %c0_i32 = arith.constant 0 : i32
    %c0_i32_0 = arith.constant 0 : i32
    %c0_i32_1 = arith.constant 0 : i32
    return %c0_i32, %c0_i32_0 : i32, i32
  }
  func.func @transform_2(%arg0: i32, %arg1: i32) -> (i32, i32) {
    %c0_i32 = arith.constant 0 : i32
    %c0_i32_0 = arith.constant 0 : i32
    %c0_i32_1 = arith.constant 0 : i32
    return %c0_i32, %c0_i32_0 : i32, i32
  }
  func.func @transform_3(%arg0: i32, %arg1: i32) -> (i32, i32) {
    %c0_i32 = arith.constant 0 : i32
    %c0_i32_0 = arith.constant 0 : i32
    return %c0_i32, %arg1 : i32, i32
  }
  func.func @transform_4(%arg0: i32, %arg1: i32) -> (i32, i32) {
    %c0_i32 = arith.constant 0 : i32
    %c0_i32_0 = arith.constant 0 : i32
    return %c0_i32, %arg1 : i32, i32
  }
  func.func @transform_5(%arg0: i32, %arg1: i32) -> (i32, i32) {
    %c0_i32 = arith.constant 0 : i32
    return %arg0, %arg1 : i32, i32
  }
}

</mosaic_0001>

<llo_original>
// kernel: tpu_custom_call.1
$region0: #{tpu_custom_call.1}
  #allocation0 [shape = 'u32[]', space=smem, size = 0x4, offset = 0x4, fixed_abs, tag = 'smem constant byte address 0x4 - core index']
  #allocation1 [shape = 'u32[144,128]{1,0:T(1,128)}', space=vmem, size = 0x12000, scoped, tag = 'internal scratch']
  #allocation2 [shape = 'f32[32,128]{1,0:T(8,128)}', space=vmem, size = 0x4000, scoped, tag = 'scratch operand']
  %s0 = inlined_call_operand.hbm [shape: f32[32,128], index: 0, kind: input, shape index: {}]
  %s1 = inlined_call_operand.vmem [shape: f32[1,128], index: 1, kind: input, shape index: {}]
  %s2 = inlined_call_operand.vmem [shape: f32[1,128], index: 2, kind: input, shape index: {}]
  %s3 = inlined_call_operand.hbm [shape: f32[128,128], index: 3, kind: input, shape index: {}]
  %s4 = inlined_call_operand.vmem [shape: f32[1,128], index: 4, kind: input, shape index: {}]
  %s5 = inlined_call_operand.hbm [shape: f32[32,128], index: 5, kind: output, shape index: {}]
  %s6 = sld [smem:[#allocation0]]
  $region42: #{tpu_custom_call.1} parent=0
    _
  %s8 = ssub.s32 1, %s6
  %s9 = scalar_select 0, %s8, %s6
  $region1: #{tpu_custom_call.1} parent=0
    #allocation3 [shape = 'u8[16384]{0}', space=vmem, size = 0x4000, scoped, tag = 'input window, operand 0, single buffered']
    #allocation4 [shape = 's32[1]{0}', space=sflag, size = 0x4, scoped, tag = 'scoped memory for tpu_custom_call.1']
    #allocation5 [shape = 's32[1]{0}', space=sflag, size = 0x4, scoped, tag = 'scoped memory for tpu_custom_call.1']
    #allocation6 [shape = 'u8[65536]{0}', space=vmem, size = 0x10000, scoped, tag = 'input window, operand 3, single buffered']
    #allocation7 [shape = 's32[1]{0}', space=sflag, size = 0x4, scoped, tag = 'scoped memory for tpu_custom_call.1']
    #allocation8 [shape = 'u8[16384]{0}', space=vmem, size = 0x4000, scoped, tag = 'output window, operand 0, single buffered']
    %10 = vsyncpa [#allocation4], 0
    %11 = vsyncpa [#allocation7], 0
    %12 = vsyncpa [#allocation5], 0
    // Predicated region
    $region2: #{tpu_custom_call.1} parent=1 // pred_check
      _
    $region3: #{tpu_custom_call.1} parent=1 // pred_check_branch
      %14 = sbr.rel (0) target = $region5
    $region4: #{tpu_custom_call.1} parent=1 // pred_region
      %s16 = ssub.s32 512, 512
      %17 = vsyncadd [#allocation4], %s16
      %s18 = sshll.u32 [#allocation3], 4
      %s19 = int_to_ptr.vmem [resolvable:$true] %s18
      %24 = dma.hbm_to_vmem [thread:$0]  %s0, 512, %s19, [#allocation4], 128, 128, 8
    $region5: #{tpu_custom_call.1} parent=1 // pred_fallthru
      _
    // Predicated region
    $region6: #{tpu_custom_call.1} parent=1 // pred_check
      _
    $region7: #{tpu_custom_call.1} parent=1 // pred_check_branch
      %26 = sbr.rel (0) target = $region9
    $region8: #{tpu_custom_call.1} parent=1 // pred_region
      _
    $region9: #{tpu_custom_call.1} parent=1 // pred_fallthru
      _
    // Predicated region
    $region10: #{tpu_custom_call.1} parent=1 // pred_check
      _
    $region11: #{tpu_custom_call.1} parent=1 // pred_check_branch
      %28 = sbr.rel (0) target = $region13
    $region12: #{tpu_custom_call.1} parent=1 // pred_region
      _
    $region13: #{tpu_custom_call.1} parent=1 // pred_fallthru
      _
    // Predicated region
    $region14: #{tpu_custom_call.1} parent=1 // pred_check
      _
    $region15: #{tpu_custom_call.1} parent=1 // pred_check_branch
      %30 = sbr.rel (0) target = $region17
    $region16: #{tpu_custom_call.1} parent=1 // pred_region
      %s32 = ssub.s32 2048, 2048
      %33 = vsyncadd [#allocation7], %s32
      %s34 = sshll.u32 [#allocation6], 4
      %s35 = int_to_ptr.vmem [resolvable:$true] %s34
      %40 = dma.hbm_to_vmem [thread:$0]  %s3, 2048, %s35, [#allocation7], 128, 128, 8
    $region17: #{tpu_custom_call.1} parent=1 // pred_fallthru
      _
    // Predicated region
    $region18: #{tpu_custom_call.1} parent=1 // pred_check
      _
    $region19: #{tpu_custom_call.1} parent=1 // pred_check_branch
      %42 = sbr.rel (0) target = $region21
    $region20: #{tpu_custom_call.1} parent=1 // pred_region
      _
    $region21: #{tpu_custom_call.1} parent=1 // pred_fallthru
      _
    // Predicated region
    $region22: #{tpu_custom_call.1} parent=1 // pred_check
      _
    $region23: #{tpu_custom_call.1} parent=1 // pred_check_branch
      %44 = sbr.rel (0) target = $region25
    $region24: #{tpu_custom_call.1} parent=1 // pred_region
      %45 = dma.done [#allocation4], 512
    $region25: #{tpu_custom_call.1} parent=1 // pred_fallthru
      _
    // Predicated region
    $region26: #{tpu_custom_call.1} parent=1 // pred_check
      _
    $region27: #{tpu_custom_call.1} parent=1 // pred_check_branch
      %47 = sbr.rel (0) target = $region29
    $region28: #{tpu_custom_call.1} parent=1 // pred_region
      %48 = dma.done [#allocation7], 2048
    $region29: #{tpu_custom_call.1} parent=1 // pred_fallthru
      _
    %p49 = scmp.eq.s32.totalorder 0, 0
    // Predicated region
    $region30: #{tpu_custom_call.1} parent=1 // pred_check
      %p50 = pneg %p49
    $region31: #{tpu_custom_call.1} parent=1 // pred_check_branch
      %52 = sbr.rel (%p50) target = $region33
    $region32: #{tpu_custom_call.1} parent=1 // pred_region
      %v53 = vld [vmem:[#allocation3] sm:$0xff]
      %v54 = vld [vmem:[#allocation3 + $0x8] sm:$0xff]
      %v55 = vld [vmem:[#allocation3 + $0x10] sm:$0xff]
      %v56 = vld [vmem:[#allocation3 + $0x18] sm:$0xff]
      %57 = vadd.xlane.f32.xlu0 %v53
      %v58 = vpop.xlane.xlu0 %57
      %59 = vadd.xlane.f32.xlu0 %v54
      %v60 = vpop.xlane.xlu0 %59
      %61 = vadd.xlane.f32.xlu0 %v55
      %v62 = vpop.xlane.xlu0 %61
      %63 = vadd.xlane.f32.xlu0 %v56
      %v64 = vpop.xlane.xlu0 %63
      %v65 = vmul.f32 %v53, %v53
      %v66 = vmul.f32 %v54, %v54
      %v67 = vmul.f32 %v55, %v55
      %v68 = vmul.f32 %v56, %v56
      %69 = vadd.xlane.f32.xlu0 %v65
      %v70 = vpop.xlane.xlu0 %69
      %71 = vadd.xlane.f32.xlu0 %v66
      %v72 = vpop.xlane.xlu0 %71
      %73 = vadd.xlane.f32.xlu0 %v67
      %v74 = vpop.xlane.xlu0 %73
      %75 = vadd.xlane.f32.xlu0 %v68
      %v76 = vpop.xlane.xlu0 %75
      %v77 = vmul.f32 %v58, 0.0078125
      %v78 = vmul.f32 %v60, 0.0078125
      %v79 = vmul.f32 %v62, 0.0078125
      %v80 = vmul.f32 %v64, 0.0078125
      %v81 = vmul.f32 %v70, 0.0078125
      %v82 = vmul.f32 %v72, 0.0078125
      %v83 = vmul.f32 %v74, 0.0078125
      %v84 = vmul.f32 %v76, 0.0078125
      %v85 = vmul.f32 %v77, %v77
      %v86 = vmul.f32 %v78, %v78
      %v87 = vmul.f32 %v79, %v79
      %v88 = vmul.f32 %v80, %v80
      %v89 = vsub.f32 %v81, %v85
      %v90 = vsub.f32 %v82, %v86
      %v91 = vsub.f32 %v83, %v87
      %v92 = vsub.f32 %v84, %v88
      %v93 = vmax.f32 %v89, 0.0
      %v94 = vmax.f32 %v90, 0.0
      %v95 = vmax.f32 %v91, 0.0
      %v96 = vmax.f32 %v92, 0.0
      %v97 = vsub.f32 %v53, %v77
      %v98 = vsub.f32 %v54, %v78
      %v99 = vsub.f32 %v55, %v79
      %v100 = vsub.f32 %v56, %v80
      %v101 = vadd.f32 %v93, 1e-05
      %v102 = vadd.f32 %v94, 1e-05
      %v103 = vadd.f32 %v95, 1e-05
      %v104 = vadd.f32 %v96, 1e-05
      %v105 = vrsqrt.pop %v101
      %v106 = vrsqrt.pop %v102
      %v107 = vrsqrt.pop %v103
      %v108 = vrsqrt.pop %v104
      %v109 = vmul.f32 %v97, %v105
      %v110 = vmul.f32 %v98, %v106
      %v111 = vmul.f32 %v99, %v107
      %v112 = vmul.f32 %v100, %v108
      %v113 = vld [vmem:[%s1] sm:$0x1]
      %v115 = vlaneseq
      %v116 = vshrl.u32 %v115, 7
      %v117 = vsub.s32 0, %v116
      %v118 = vrot.slane %v113, %v117
      %v120 = vmul.f32 %v109, %v118
      %v121 = vmul.f32 %v110, %v118
      %v122 = vmul.f32 %v111, %v118
      %v123 = vmul.f32 %v112, %v118
      %v124 = vld [vmem:[%s2] sm:$0x1]
      %v126 = vlaneseq
      %v127 = vshrl.u32 %v126, 7
      %v128 = vsub.s32 0, %v127
      %v129 = vrot.slane %v124, %v128
      %v131 = vadd.f32 %v120, %v129
      %v132 = vadd.f32 %v121, %v129
      %v133 = vadd.f32 %v122, %v129
      %v134 = vadd.f32 %v123, %v129
      %135 = vst [vmem:[#allocation2] sm:$0xff] %v131
      %136 = vst [vmem:[#allocation2 + $0x8] sm:$0xff] %v132
      %137 = vst [vmem:[#allocation2 + $0x10] sm:$0xff] %v133
      %138 = vst [vmem:[#allocation2 + $0x18] sm:$0xff] %v134
    $region33: #{tpu_custom_call.1} parent=1 // pred_fallthru
      _
    %v139 = vld [vmem:[#allocation2] sm:$0xff]
    %v140 = vld [vmem:[#allocation2 + $0x8] sm:$0xff]
    %v141 = vld [vmem:[#allocation2 + $0x10] sm:$0xff]
    %v142 = vld [vmem:[#allocation2 + $0x18] sm:$0xff]
    %v143 = vld [vmem:[#allocation6] sm:$0xff]
    %v144 = vld [vmem:[#allocation6 + $0x8] sm:$0xff]
    %v145 = vld [vmem:[#allocation6 + $0x10] sm:$0xff]
    %v146 = vld [vmem:[#allocation6 + $0x18] sm:$0xff]
    %v147 = vld [vmem:[#allocation6 + $0x20] sm:$0xff]
    %v148 = vld [vmem:[#allocation6 + $0x28] sm:$0xff]
    %v149 = vld [vmem:[#allocation6 + $0x30] sm:$0xff]
    %v150 = vld [vmem:[#allocation6 + $0x38] sm:$0xff]
    %v151 = vld [vmem:[#allocation6 + $0x40] sm:$0xff]
    %v152 = vld [vmem:[#allocation6 + $0x48] sm:$0xff]
    %v153 = vld [vmem:[#allocation6 + $0x50] sm:$0xff]
    %v154 = vld [vmem:[#allocation6 + $0x58] sm:$0xff]
    %v155 = vld [vmem:[#allocation6 + $0x60] sm:$0xff]
    %v156 = vld [vmem:[#allocation6 + $0x68] sm:$0xff]
    %v157 = vld [vmem:[#allocation6 + $0x70] sm:$0xff]
    %v158 = vld [vmem:[#allocation6 + $0x78] sm:$0xff]
    %v159 = vld [vmem:[%s4] sm:$0x1]
    %v161 = vlaneseq
    %v162 = vshrl.u32 %v161, 7
    %v163 = vsub.s32 0, %v162
    %v164 = vrot.slane %v159, %v163
    %166 = vmatprep.subr.mxu0 0.0
    %167 = vmatpush1.msra.mxu0 %v158
    %168 = vmatprep.subr.mxu0 0.0
    %169 = vmatpush1.msra.mxu0 %v157
    %170 = vmatprep.subr.mxu0 0.0
    %171 = vmatpush1.msra.mxu0 %v156
    %172 = vmatprep.subr.mxu0 0.0
    %173 = vmatpush1.msra.mxu0 %v155
    %174 = vmatprep.subr.mxu0 0.0
    %175 = vmatpush1.msra.mxu0 %v154
    %176 = vmatprep.subr.mxu0 0.0
    %177 = vmatpush1.msra.mxu0 %v153
    %178 = vmatprep.subr.mxu0 0.0
    %179 = vmatpush1.msra.mxu0 %v152
    %180 = vmatprep.subr.mxu0 0.0
    %181 = vmatpush1.msra.mxu0 %v151
    %182 = vmatprep.subr.mxu0 0.0
    %183 = vmatpush1.msra.mxu0 %v150
    %184 = vmatprep.subr.mxu0 0.0
    %185 = vmatpush1.msra.mxu0 %v149
    %186 = vmatprep.subr.mxu0 0.0
    %187 = vmatpush1.msra.mxu0 %v148
    %188 = vmatprep.subr.mxu0 0.0
    %189 = vmatpush1.msra.mxu0 %v147
    %190 = vmatprep.subr.mxu0 0.0
    %191 = vmatpush1.msra.mxu0 %v146
    %192 = vmatprep.subr.mxu0 0.0
    %193 = vmatpush1.msra.mxu0 %v145
    %194 = vmatprep.subr.mxu0 0.0
    %195 = vmatpush1.msra.mxu0 %v144
    %196 = vmatprep.subr.mxu0 0.0
    %197 = vmatpush1.msra.mxu0 %v143
    %198 = vmatprep.subr.mxu0 0.0
    %199 = vmatpush2.msra.mxu0 0.0
    %200 = vmatprep.subr.mxu0 0.0
    %201 = vmatpush2.msra.mxu0 0.0
    %202 = vmatprep.subr.mxu0 0.0
    %203 = vmatpush2.msra.mxu0 0.0
    %204 = vmatprep.subr.mxu0 0.0
    %205 = vmatpush2.msra.mxu0 0.0
    %206 = vmatprep.subr.mxu0 0.0
    %207 = vmatpush2.msra.mxu0 0.0
    %208 = vmatprep.subr.mxu0 0.0
    %209 = vmatpush2.msra.mxu0 0.0
    %210 = vmatprep.subr.mxu0 0.0
    %211 = vmatpush2.msra.mxu0 0.0
    %212 = vmatprep.subr.mxu0 0.0
    %213 = vmatpush2.msra.mxu0 0.0
    %214 = vmatprep.subr.mxu0 0.0
    %215 = vmatpush2.msra.mxu0 0.0
    %216 = vmatprep.subr.mxu0 0.0
    %217 = vmatpush2.msra.mxu0 0.0
    %218 = vmatprep.subr.mxu0 0.0
    %219 = vmatpush2.msra.mxu0 0.0
    %220 = vmatprep.subr.mxu0 0.0
    %221 = vmatpush2.msra.mxu0 0.0
    %222 = vmatprep.subr.mxu0 0.0
    %223 = vmatpush2.msra.mxu0 0.0
    %224 = vmatprep.subr.mxu0 0.0
    %225 = vmatpush2.msra.mxu0 0.0
    %226 = vmatprep.subr.mxu0 0.0
    %227 = vmatpush2.msra.mxu0 0.0
    %228 = vmatprep.subr.mxu0 0.0
    %229 = vmatpush2.msra.mxu0 0.0
    %230 = vmatprep.mubr.f32.mxu0 0.0
    %231 = vmatmul.mubr.f32.gmra.mxu0 %v139
    %v232 = vpop.f32.mrf.mxu0
    %v233 = vadd.f32 %v164, %v232
    %v234 = vpop.f32.mrf.mxu0
    %235 = vmatprep.mubr.f32.mxu0 0.0
    %236 = vmatmul.mubr.f32.gmra.mxu0 %v140
    %v237 = vpop.f32.mrf.mxu0
    %v238 = vadd.f32 %v164, %v237
    %v239 = vpop.f32.mrf.mxu0
    %240 = vmatprep.mubr.f32.mxu0 0.0
    %241 = vmatmul.mubr.f32.gmra.mxu0 %v141
    %v242 = vpop.f32.mrf.mxu0
    %v243 = vadd.f32 %v164, %v242
    %v244 = vpop.f32.mrf.mxu0
    %245 = vmatprep.mubr.f32.mxu0 0.0
    %246 = vmatmul.mubr.f32.gmra.mxu0 %v142
    %v247 = vpop.f32.mrf.mxu0
    %v248 = vadd.f32 %v164, %v247
    %v249 = vpop.f32.mrf.mxu0
    %250 = vdwg.mxu0
    %251 = vst [vmem:[#allocation8] sm:$0xff] %v233
    %252 = vst [vmem:[#allocation8 + $0x8] sm:$0xff] %v238
    %253 = vst [vmem:[#allocation8 + $0x10] sm:$0xff] %v243
    %254 = vst [vmem:[#allocation8 + $0x18] sm:$0xff] %v248
    // Predicated region
    $region34: #{tpu_custom_call.1} parent=1 // pred_check
      _
    $region35: #{tpu_custom_call.1} parent=1 // pred_check_branch
      %256 = sbr.rel (0) target = $region37
    $region36: #{tpu_custom_call.1} parent=1 // pred_region
      %s258 = ssub.s32 512, 512
      %259 = vsyncadd [#allocation5], %s258
      %s260 = sshll.u32 [#allocation8], 4
      %s261 = int_to_ptr.vmem [resolvable:$true] %s260
      %266 = dma.vmem_to_hbm [thread:$0]  %s261, 512, %s5, [#allocation5], 128, 128, 8
    $region37: #{tpu_custom_call.1} parent=1 // pred_fallthru
      _
    // Predicated region
    $region38: #{tpu_custom_call.1} parent=1 // pred_check
      _
    $region39: #{tpu_custom_call.1} parent=1 // pred_check_branch
      %268 = sbr.rel (0) target = $region41
    $region40: #{tpu_custom_call.1} parent=1 // pred_region
      %269 = dma.done [#allocation5], 512
    $region41: #{tpu_custom_call.1} parent=1 // pred_fallthru
      _
    %270 = vsyncpa [#allocation4], 1
    %271 = vsyncpa [#allocation7], 1
    %272 = vsyncpa [#allocation5], 1

</llo_original>
